<compile_context>
chip_gen: v6e
topology: v6e:2x2x1
jax: 0.10.0
libtpu: 0.0.40
codegen_flags: <defaults>
</compile_context>

<pallas_src>
import jax
import jax.numpy as jnp
from jax.experimental import pallas as pl
from jax.experimental.pallas import tpu as pltpu


def _lws_kernel(scale_ref, x_ref, o_ref):
    # scale_ref: (1, TC) tile; x_ref / o_ref: (TB, TC) tiles.
    # Elementwise multiply with broadcast over the batch (sublane) axis.
    o_ref[...] = (x_ref[...] * scale_ref[...]).astype(o_ref.dtype)


def _pick_tile(dim: int, max_tile: int) -> int:
    # Full-extent blocks are always layout-legal; otherwise use max_tile,
    # which is chosen as a multiple of the (8, 128) alignment below.
    return dim if dim <= max_tile else max_tile


def learnable_weight_scaling(x: jax.Array, learned_norm: jax.Array) -> jax.Array:
    """Computes learned_norm * x with broadcasting, like the nn.Module forward."""
    B, C = x.shape
    assert learned_norm.shape == (1, C)

    # Large, lane-dense tiles: 512x512 f32 = 1 MiB/buffer; with double-buffered
    # x and out that is ~4-5 MiB, well inside the scoped VMEM default on all of
    # v5e / v6e / v7x while being big enough (~0.26M elems) to amortize the
    # ~0.35 us per-grid-step overhead and approach the HBM roofline.
    TB = _pick_tile(B, 512)    # sublane axis: 512 is a multiple of 8
    TC = _pick_tile(C, 512)    # lane axis:    512 is a multiple of 128
    # Note: if C < 128 (like the small test below) the store lanes are masked;
    # for production shapes num_classes is typically >= 128 so blocks are
    # lane-dense. For a standalone tiny op, prefer XLA fusion over this kernel.

    grid_b = pl.cdiv(B, TB)
    grid_c = pl.cdiv(C, TC)

    return pl.pallas_call(
        _lws_kernel,
        out_shape=jax.ShapeDtypeStruct((B, C), x.dtype),
        grid_spec=pltpu.PrefetchScalarGridSpec(
            num_scalar_prefetch=0,
            # Class axis outer / batch axis inner: the (1, TC) scale block's
            # index only changes with the outer axis, so it is fetched once per
            # class-tile and stays resident across the inner batch sweep.
            grid=(grid_c, grid_b),
            in_specs=[
                pl.BlockSpec((1, TC), lambda j, i: (0, j)),    # learned_norm
                pl.BlockSpec((TB, TC), lambda j, i: (i, j)),   # x
            ],
            out_specs=pl.BlockSpec((TB, TC), lambda j, i: (i, j)),
        ),
        compiler_params=pltpu.CompilerParams(
            # Every tile is independent (no reduction): both axes parallel so
            # the grid can be split across TensorCores on v7x (2 TCs/chip).
            dimension_semantics=("parallel", "parallel"),
        ),
    )(learned_norm, x)


if __name__ == "__main__":
    key = jax.random.PRNGKey(0)
    batch, num_classes = 8, 32

    # Parameter init matches nn.Parameter(torch.ones(1, num_classes)),
    # perturbed deterministically so the scale actually does something.
    learned_norm = jnp.ones((1, num_classes), dtype=jnp.float32)
    learned_norm = learned_norm + 0.1 * jax.random.normal(
        key, (1, num_classes), dtype=jnp.float32
    )

    x = jax.random.normal(
        jax.random.fold_in(key, 1), (batch, num_classes), dtype=jnp.float32
    )

    out = learnable_weight_scaling(x, learned_norm)
    out = jax.block_until_ready(out)

    ref = learned_norm * x
    assert out.shape == (batch, num_classes)
    assert out.dtype == x.dtype
    assert jnp.allclose(out, ref, atol=1e-6, rtol=1e-6)
    print("KERNEL_OK")
</pallas_src>

<mosaic_0001>
module attributes {stable_mosaic.version = 11 : i64} {
  func.func @_lws_kernel(%arg0: i32, %arg1: i32, %arg2: memref<1x32xf32, #tpu.memory_space<vmem>>, %arg3: memref<8x32xf32, #tpu.memory_space<vmem>>, %arg4: memref<8x32xf32, #tpu.memory_space<vmem>>) attributes {dimension_semantics = [#tpu.dimension_semantics<parallel>, #tpu.dimension_semantics<parallel>], iteration_bounds = array<i64: 1, 1>, scalar_prefetch = 0 : i64, scratch_operands = 0 : i64, tpu.core_type = #tpu.core_type<tc>, window_params = [{transform_indices = @transform_0, window_bounds = array<i64: 1, 32>}, {transform_indices = @transform_1, window_bounds = array<i64: 8, 32>}, {transform_indices = @transform_2, window_bounds = array<i64: 8, 32>}]} {
    %c0 = arith.constant 0 : index
    %c0_0 = arith.constant 0 : index
    %0 = vector.load %arg3[%c0, %c0_0] : memref<8x32xf32, #tpu.memory_space<vmem>>, vector<8x32xf32>
    %c0_1 = arith.constant 0 : index
    %c0_2 = arith.constant 0 : index
    %1 = vector.load %arg2[%c0_1, %c0_2] : memref<1x32xf32, #tpu.memory_space<vmem>>, vector<1x32xf32>
    %2 = vector.broadcast %1 : vector<1x32xf32> to vector<8x32xf32>
    %3 = arith.mulf %0, %2 : vector<8x32xf32>
    %c0_3 = arith.constant 0 : index
    %c0_4 = arith.constant 0 : index
    %4 = vector.load %arg4[%c0_3, %c0_4] : memref<8x32xf32, #tpu.memory_space<vmem>>, vector<8x32xf32>
    tpu.vector_store %arg4[%c0_3, %c0_4], %3 {strides = array<i32>} : memref<8x32xf32, #tpu.memory_space<vmem>>, vector<8x32xf32>,
    return
  }
  func.func @transform_0(%arg0: i32, %arg1: i32) -> (i32, i32) {
    %c0_i32 = arith.constant 0 : i32
    %c0_i32_0 = arith.constant 0 : i32
    return %c0_i32, %arg0 : i32, i32
  }
  func.func @transform_1(%arg0: i32, %arg1: i32) -> (i32, i32) {
    %c0_i32 = arith.constant 0 : i32
    return %arg1, %arg0 : i32, i32
  }
  func.func @transform_2(%arg0: i32, %arg1: i32) -> (i32, i32) {
    %c0_i32 = arith.constant 0 : i32
    return %arg1, %arg0 : i32, i32
  }
}

</mosaic_0001>

<llo_original>
// kernel: tpu_custom_call.1
$region0: #{tpu_custom_call.1}
  #allocation0 [shape = 'u32[]', space=smem, size = 0x4, offset = 0x4, fixed_abs, tag = 'smem constant byte address 0x4 - core index']
  #allocation1 [shape = 'u32[144,128]{1,0:T(1,128)}', space=vmem, size = 0x12000, scoped, tag = 'internal scratch']
  %s0 = inlined_call_operand.hbm [shape: f32[1,32], index: 0, kind: input, shape index: {}]
  %s1 = inlined_call_operand.hbm [shape: f32[8,32], index: 1, kind: input, shape index: {}]
  %s2 = inlined_call_operand.hbm [shape: f32[8,32], index: 2, kind: output, shape index: {}]
  %s3 = sld [smem:[#allocation0]]
  $region26: #{tpu_custom_call.1} parent=0
    _
  %s5 = ssub.s32 1, %s3
  %s6 = scalar_select 0, %s5, %s3
  $region1: #{tpu_custom_call.1} parent=0
    #allocation2 [shape = 'u8[512]{0}', space=vmem, size = 0x400, scoped, tag = 'input window, operand 0, single buffered']
    #allocation3 [shape = 's32[1]{0}', space=sflag, size = 0x4, scoped, tag = 'scoped memory for tpu_custom_call.1']
    #allocation4 [shape = 's32[1]{0}', space=sflag, size = 0x4, scoped, tag = 'scoped memory for tpu_custom_call.1']
    #allocation5 [shape = 'u8[4096]{0}', space=vmem, size = 0x1000, scoped, tag = 'input window, operand 1, single buffered']
    #allocation6 [shape = 's32[1]{0}', space=sflag, size = 0x4, scoped, tag = 'scoped memory for tpu_custom_call.1']
    #allocation7 [shape = 'u8[4096]{0}', space=vmem, size = 0x1000, scoped, tag = 'output window, operand 0, single buffered']
    %7 = vsyncpa [#allocation3], 0
    %8 = vsyncpa [#allocation6], 0
    %9 = vsyncpa [#allocation4], 0
    // Predicated region
    $region2: #{tpu_custom_call.1} parent=1 // pred_check
      _
    $region3: #{tpu_custom_call.1} parent=1 // pred_check_branch
      %11 = sbr.rel (0) target = $region5
    $region4: #{tpu_custom_call.1} parent=1 // pred_region
      %s13 = ssub.s32 16, 16
      %14 = vsyncadd [#allocation3], %s13
      %s16 = sshll.u32 [#allocation2], 4
      %s17 = int_to_ptr.vmem [resolvable:$true] %s16
      %19 = dma.hbm_to_vmem [thread:$0]  %s0, 16, %s17, [#allocation3]
    $region5: #{tpu_custom_call.1} parent=1 // pred_fallthru
      _
    // Predicated region
    $region6: #{tpu_custom_call.1} parent=1 // pred_check
      _
    $region7: #{tpu_custom_call.1} parent=1 // pred_check_branch
      %21 = sbr.rel (0) target = $region9
    $region8: #{tpu_custom_call.1} parent=1 // pred_region
      %s23 = ssub.s32 128, 128
      %24 = vsyncadd [#allocation6], %s23
      %s26 = sshll.u32 [#allocation5], 4
      %s27 = int_to_ptr.vmem [resolvable:$true] %s26
      %29 = dma.hbm_to_vmem [thread:$0]  %s1, 128, %s27, [#allocation6]
    $region9: #{tpu_custom_call.1} parent=1 // pred_fallthru
      _
    // Predicated region
    $region10: #{tpu_custom_call.1} parent=1 // pred_check
      _
    $region11: #{tpu_custom_call.1} parent=1 // pred_check_branch
      %31 = sbr.rel (0) target = $region13
    $region12: #{tpu_custom_call.1} parent=1 // pred_region
      %32 = dma.done [#allocation3], 16
    $region13: #{tpu_custom_call.1} parent=1 // pred_fallthru
      _
    // Predicated region
    $region14: #{tpu_custom_call.1} parent=1 // pred_check
      _
    $region15: #{tpu_custom_call.1} parent=1 // pred_check_branch
      %34 = sbr.rel (0) target = $region17
    $region16: #{tpu_custom_call.1} parent=1 // pred_region
      %35 = dma.done [#allocation6], 128
    $region17: #{tpu_custom_call.1} parent=1 // pred_fallthru
      _
    %v36 = vld [vmem:[#allocation5] sm:$0xff]
    %v37 = vld [vmem:[#allocation2] sm:$0x1]
    %v39 = vlaneseq
    %v40 = vshrl.u32 %v39, 7
    %v41 = vsub.s32 0, %v40
    %v42 = vrot.slane %v37, %v41
    %v44 = vmul.f32 %v36, %v42
    %vm45 = vcmask 261120
    %46 = vst.msk [vmem:[#allocation7] sm:$0xff] %vm45, %v44
    // Predicated region
    $region18: #{tpu_custom_call.1} parent=1 // pred_check
      _
    $region19: #{tpu_custom_call.1} parent=1 // pred_check_branch
      %48 = sbr.rel (0) target = $region21
    $region20: #{tpu_custom_call.1} parent=1 // pred_region
      %s50 = ssub.s32 128, 128
      %51 = vsyncadd [#allocation4], %s50
      %s53 = sshll.u32 [#allocation7], 4
      %s54 = int_to_ptr.vmem [resolvable:$true] %s53
      %56 = dma.vmem_to_hbm [thread:$0]  %s54, 128, %s2, [#allocation4]
    $region21: #{tpu_custom_call.1} parent=1 // pred_fallthru
      _
    // Predicated region
    $region22: #{tpu_custom_call.1} parent=1 // pred_check
      _
    $region23: #{tpu_custom_call.1} parent=1 // pred_check_branch
      %58 = sbr.rel (0) target = $region25
    $region24: #{tpu_custom_call.1} parent=1 // pred_region
      %59 = dma.done [#allocation4], 128
    $region25: #{tpu_custom_call.1} parent=1 // pred_fallthru
      _
    %60 = vsyncpa [#allocation3], 1
    %61 = vsyncpa [#allocation6], 1
    %62 = vsyncpa [#allocation4], 1

</llo_original>
